<compile_context>
chip_gen: v5e
topology: v5e:2x2
jax: 0.10.0
libtpu: 0.0.40
codegen_flags: <defaults>
</compile_context>

<pallas_src>
import jax
import jax.numpy as jnp
from jax.experimental import pallas as pl
from jax.experimental.pallas import tpu as pltpu


def _round_up(x, m):
    return (x + m - 1) // m * m


def _mlp_kernel(z_ref, w1_ref, b1_ref, w2_ref, b2_ref, w3_ref, b3_ref, o_ref):
    # Layer 1: Linear + ReLU (Dropout = identity at inference).
    h1 = jnp.dot(z_ref[...], w1_ref[...], preferred_element_type=jnp.float32)
    h1 = jnp.maximum(h1 + b1_ref[...], 0.0).astype(jnp.bfloat16)

    # Layer 2: Linear + ReLU.
    h2 = jnp.dot(h1, w2_ref[...], preferred_element_type=jnp.float32)
    h2 = jnp.maximum(h2 + b2_ref[...], 0.0).astype(jnp.bfloat16)

    # Output layer: Linear (logits). Columns >= num_attributes are zero-padded.
    out = jnp.dot(h2, w3_ref[...], preferred_element_type=jnp.float32) + b3_ref[...]
    o_ref[...] = out.astype(o_ref.dtype)


def attribute_classifier(z, params, *, tile_b=1024):
    """Fused 3-layer MLP classifier.

    z:      (B, latent_dim) float array
    params: dict with w1 (latent,256), b1 (1,256), w2 (256,128), b2 (1,128),
            w3 (128,num_attr), b3 (1,num_attr)  -- (in_features, out_features) layout.
    returns (B, num_attr) float32 logits.
    """
    B, D = z.shape
    H1 = params["w1"].shape[1]
    H2 = params["w2"].shape[1]
    num_attr = params["w3"].shape[1]
    n_pad = _round_up(num_attr, 128)          # lane-dense output width

    # bf16 weights (halves weight-fetch traffic, bf16-native MXU); f32 biases.
    w1 = params["w1"].astype(jnp.bfloat16)
    w2 = params["w2"].astype(jnp.bfloat16)
    w3 = jnp.zeros((H2, n_pad), jnp.bfloat16).at[:, :num_attr].set(
        params["w3"].astype(jnp.bfloat16))
    b1 = params["b1"].astype(jnp.float32)
    b2 = params["b2"].astype(jnp.float32)
    b3 = jnp.zeros((1, n_pad), jnp.float32).at[:, :num_attr].set(
        params["b3"].astype(jnp.float32))

    # Batch tiling: tile rows of z, pad the tail block with zeros.
    tile_b = min(tile_b, _round_up(B, 8))
    b_pad = _round_up(B, tile_b)
    z_bf = z.astype(jnp.bfloat16)
    if b_pad != B:
        z_bf = jnp.pad(z_bf, ((0, b_pad - B), (0, 0)))
    grid = (b_pad // tile_b,)

    const = lambda i: (0, 0)                  # weights stay VMEM-resident
    in_specs = [
        pl.BlockSpec((tile_b, D), lambda i: (i, 0)),   # z tile (pipelined)
        pl.BlockSpec((D, H1), const),
        pl.BlockSpec((1, H1), const),
        pl.BlockSpec((H1, H2), const),
        pl.BlockSpec((1, H2), const),
        pl.BlockSpec((H2, n_pad), const),
        pl.BlockSpec((1, n_pad), const),
    ]
    out_specs = pl.BlockSpec((tile_b, n_pad), lambda i: (i, 0))

    # VMEM budget: double-buffered z/out tiles + resident weights + slack.
    weight_bytes = (D * H1 + H1 * H2 + H2 * n_pad) * 2 + (H1 + H2 + n_pad) * 4
    tile_bytes = tile_b * D * 2 + tile_b * n_pad * 4
    vmem_bytes = min(64 << 20,
                     max(2 * (2 * tile_bytes + 2 * weight_bytes) + (4 << 20),
                         16 << 20))

    flops = 2 * b_pad * (D * H1 + H1 * H2 + H2 * n_pad)
    bytes_accessed = b_pad * D * 2 + weight_bytes + b_pad * n_pad * 4

    out = pl.pallas_call(
        _mlp_kernel,
        out_shape=jax.ShapeDtypeStruct((b_pad, n_pad), jnp.float32),
        grid=grid,
        in_specs=in_specs,
        out_specs=out_specs,
        compiler_params=pltpu.CompilerParams(
            dimension_semantics=("parallel",),
            vmem_limit_bytes=int(vmem_bytes)),
        cost_estimate=pl.CostEstimate(
            flops=int(flops), transcendentals=0,
            bytes_accessed=int(bytes_accessed)),
    )(z_bf, w1, b1, w2, b2, w3, b3)

    return out[:B, :num_attr]


def init_params(key, latent_dim=512, hidden_dims=(256, 128), num_attributes=40):
    """Deterministic synthetic parameters (PyTorch-like uniform init),
    stored in (in_features, out_features) layout."""
    dims = (latent_dim,) + tuple(hidden_dims) + (num_attributes,)
    params = {}
    for i in range(len(dims) - 1):
        fan_in, fan_out = dims[i], dims[i + 1]
        key, kw, kb = jax.random.split(key, 3)
        bound = 1.0 / (fan_in ** 0.5)
        params[f"w{i+1}"] = jax.random.uniform(
            kw, (fan_in, fan_out), jnp.float32, -bound, bound)
        params[f"b{i+1}"] = jax.random.uniform(
            kb, (1, fan_out), jnp.float32, -bound, bound)
    return params


def _reference(z, params):
    """Pure-JAX reference mirroring the kernel's bf16-dot / f32-accumulate math."""
    w1 = params["w1"].astype(jnp.bfloat16)
    w2 = params["w2"].astype(jnp.bfloat16)
    w3 = params["w3"].astype(jnp.bfloat16)
    h = jnp.dot(z.astype(jnp.bfloat16), w1, preferred_element_type=jnp.float32)
    h = jnp.maximum(h + params["b1"], 0.0).astype(jnp.bfloat16)
    h = jnp.dot(h, w2, preferred_element_type=jnp.float32)
    h = jnp.maximum(h + params["b2"], 0.0).astype(jnp.bfloat16)
    return jnp.dot(h, w3, preferred_element_type=jnp.float32) + params["b3"]


if __name__ == "__main__":
    key = jax.random.PRNGKey(0)
    kp, kz1, kz2 = jax.random.split(key, 3)

    latent_dim, num_attributes = 512, 40
    params = init_params(kp, latent_dim=latent_dim,
                         hidden_dims=(256, 128),
                         num_attributes=num_attributes)

    # Aligned small batch.
    z = jax.random.normal(kz1, (8, latent_dim), jnp.float32)
    logits = jax.block_until_ready(attribute_classifier(z, params))
    ref = _reference(z, params)
    assert logits.shape == (8, num_attributes)
    assert jnp.allclose(logits, ref, atol=2e-2, rtol=2e-2)

    # Non-aligned batch exercises tail padding.
    z2 = jax.random.normal(kz2, (10, latent_dim), jnp.float32)
    logits2 = jax.block_until_ready(attribute_classifier(z2, params))
    ref2 = _reference(z2, params)
    assert logits2.shape == (10, num_attributes)
    assert jnp.allclose(logits2, ref2, atol=2e-2, rtol=2e-2)

    print("KERNEL_OK")
</pallas_src>

<mosaic_0001>
module attributes {stable_mosaic.version = 11 : i64} {
  func.func @_mlp_kernel(%arg0: i32, %arg1: memref<8x512xbf16, #tpu.memory_space<vmem>>, %arg2: memref<512x256xbf16, #tpu.memory_space<vmem>>, %arg3: memref<1x256xf32, #tpu.memory_space<vmem>>, %arg4: memref<256x128xbf16, #tpu.memory_space<vmem>>, %arg5: memref<1x128xf32, #tpu.memory_space<vmem>>, %arg6: memref<128x128xbf16, #tpu.memory_space<vmem>>, %arg7: memref<1x128xf32, #tpu.memory_space<vmem>>, %arg8: memref<8x128xf32, #tpu.memory_space<vmem>>) attributes {dimension_semantics = [#tpu.dimension_semantics<parallel>], iteration_bounds = array<i64: 1>, scalar_prefetch = 0 : i64, scratch_operands = 0 : i64, tpu.core_type = #tpu.core_type<tc>, window_params = [{transform_indices = @transform_0, window_bounds = array<i64: 8, 512>}, {pipeline_mode = #tpu.pipeline_mode<synchronous>, transform_indices = @transform_1, window_bounds = array<i64: 512, 256>}, {pipeline_mode = #tpu.pipeline_mode<synchronous>, transform_indices = @transform_2, window_bounds = array<i64: 1, 256>}, {pipeline_mode = #tpu.pipeline_mode<synchronous>, transform_indices = @transform_3, window_bounds = array<i64: 256, 128>}, {pipeline_mode = #tpu.pipeline_mode<synchronous>, transform_indices = @transform_4, window_bounds = array<i64: 1, 128>}, {pipeline_mode = #tpu.pipeline_mode<synchronous>, transform_indices = @transform_5, window_bounds = array<i64: 128, 128>}, {pipeline_mode = #tpu.pipeline_mode<synchronous>, transform_indices = @transform_6, window_bounds = array<i64: 1, 128>}, {transform_indices = @transform_7, window_bounds = array<i64: 8, 128>}]} {
    %c0 = arith.constant 0 : index
    %c0_0 = arith.constant 0 : index
    %0 = vector.load %arg1[%c0, %c0_0] : memref<8x512xbf16, #tpu.memory_space<vmem>>, vector<8x512xbf16>
    %c0_1 = arith.constant 0 : index
    %c0_2 = arith.constant 0 : index
    %1 = vector.load %arg2[%c0_1, %c0_2] : memref<512x256xbf16, #tpu.memory_space<vmem>>, vector<512x256xbf16>
    %cst = arith.constant dense<0.000000e+00> : vector<8x256xf32>
    %2 = tpu.matmul %0, %1, %cst {dimension_numbers = #tpu.dot_dimension_numbers<[1], [0], [0], [1], [0, 0, 1, 1], [], []>} : vector<8x512xbf16>, vector<512x256xbf16>, vector<8x256xf32> -> vector<8x256xf32>
    %c0_3 = arith.constant 0 : index
    %c0_4 = arith.constant 0 : index
    %3 = vector.load %arg3[%c0_3, %c0_4] : memref<1x256xf32, #tpu.memory_space<vmem>>, vector<1x256xf32>
    %4 = vector.broadcast %3 : vector<1x256xf32> to vector<8x256xf32>
    %5 = arith.addf %2, %4 : vector<8x256xf32>
    %cst_5 = arith.constant 0.000000e+00 : f32
    %6 = vector.broadcast %cst_5 : f32 to vector<8x256xf32>
    %7 = arith.maximumf %5, %6 : vector<8x256xf32>
    %8 = arith.truncf %7 : vector<8x256xf32> to vector<8x256xbf16>
    %c0_6 = arith.constant 0 : index
    %c0_7 = arith.constant 0 : index
    %9 = vector.load %arg4[%c0_6, %c0_7] : memref<256x128xbf16, #tpu.memory_space<vmem>>, vector<256x128xbf16>
    %cst_8 = arith.constant dense<0.000000e+00> : vector<8x128xf32>
    %10 = tpu.matmul %8, %9, %cst_8 {dimension_numbers = #tpu.dot_dimension_numbers<[1], [0], [0], [1], [0, 0, 1, 1], [], []>} : vector<8x256xbf16>, vector<256x128xbf16>, vector<8x128xf32> -> vector<8x128xf32>
    %c0_9 = arith.constant 0 : index
    %c0_10 = arith.constant 0 : index
    %11 = vector.load %arg5[%c0_9, %c0_10] : memref<1x128xf32, #tpu.memory_space<vmem>>, vector<1x128xf32>
    %12 = vector.broadcast %11 : vector<1x128xf32> to vector<8x128xf32>
    %13 = arith.addf %10, %12 : vector<8x128xf32>
    %cst_11 = arith.constant 0.000000e+00 : f32
    %14 = vector.broadcast %cst_11 : f32 to vector<8x128xf32>
    %15 = arith.maximumf %13, %14 : vector<8x128xf32>
    %16 = arith.truncf %15 : vector<8x128xf32> to vector<8x128xbf16>
    %c0_12 = arith.constant 0 : index
    %c0_13 = arith.constant 0 : index
    %17 = vector.load %arg6[%c0_12, %c0_13] : memref<128x128xbf16, #tpu.memory_space<vmem>>, vector<128x128xbf16>
    %cst_14 = arith.constant dense<0.000000e+00> : vector<8x128xf32>
    %18 = tpu.matmul %16, %17, %cst_14 {dimension_numbers = #tpu.dot_dimension_numbers<[1], [0], [0], [1], [0, 0, 1, 1], [], []>} : vector<8x128xbf16>, vector<128x128xbf16>, vector<8x128xf32> -> vector<8x128xf32>
    %c0_15 = arith.constant 0 : index
    %c0_16 = arith.constant 0 : index
    %19 = vector.load %arg7[%c0_15, %c0_16] : memref<1x128xf32, #tpu.memory_space<vmem>>, vector<1x128xf32>
    %20 = vector.broadcast %19 : vector<1x128xf32> to vector<8x128xf32>
    %21 = arith.addf %18, %20 : vector<8x128xf32>
    %c0_17 = arith.constant 0 : index
    %c0_18 = arith.constant 0 : index
    %22 = vector.load %arg8[%c0_17, %c0_18] : memref<8x128xf32, #tpu.memory_space<vmem>>, vector<8x128xf32>
    tpu.vector_store %arg8[%c0_17, %c0_18], %21 {strides = array<i32>} : memref<8x128xf32, #tpu.memory_space<vmem>>, vector<8x128xf32>,
    return
  }
  func.func @transform_0(%arg0: i32) -> (i32, i32) {
    %c0_i32 = arith.constant 0 : i32
    %c0_i32_0 = arith.constant 0 : i32
    return %arg0, %c0_i32 : i32, i32
  }
  func.func @transform_1(%arg0: i32) -> (i32, i32) {
    %c0_i32 = arith.constant 0 : i32
    %c0_i32_0 = arith.constant 0 : i32
    %c0_i32_1 = arith.constant 0 : i32
    return %c0_i32, %c0_i32_0 : i32, i32
  }
  func.func @transform_2(%arg0: i32) -> (i32, i32) {
    %c0_i32 = arith.constant 0 : i32
    %c0_i32_0 = arith.constant 0 : i32
    %c0_i32_1 = arith.constant 0 : i32
    return %c0_i32, %c0_i32_0 : i32, i32
  }
  func.func @transform_3(%arg0: i32) -> (i32, i32) {
    %c0_i32 = arith.constant 0 : i32
    %c0_i32_0 = arith.constant 0 : i32
    %c0_i32_1 = arith.constant 0 : i32
    return %c0_i32, %c0_i32_0 : i32, i32
  }
  func.func @transform_4(%arg0: i32) -> (i32, i32) {
    %c0_i32 = arith.constant 0 : i32
    %c0_i32_0 = arith.constant 0 : i32
    %c0_i32_1 = arith.constant 0 : i32
    return %c0_i32, %c0_i32_0 : i32, i32
  }
  func.func @transform_5(%arg0: i32) -> (i32, i32) {
    %c0_i32 = arith.constant 0 : i32
    %c0_i32_0 = arith.constant 0 : i32
    %c0_i32_1 = arith.constant 0 : i32
    return %c0_i32, %c0_i32_0 : i32, i32
  }
  func.func @transform_6(%arg0: i32) -> (i32, i32) {
    %c0_i32 = arith.constant 0 : i32
    %c0_i32_0 = arith.constant 0 : i32
    %c0_i32_1 = arith.constant 0 : i32
    return %c0_i32, %c0_i32_0 : i32, i32
  }
  func.func @transform_7(%arg0: i32) -> (i32, i32) {
    %c0_i32 = arith.constant 0 : i32
    %c0_i32_0 = arith.constant 0 : i32
    return %arg0, %c0_i32 : i32, i32
  }
}

</mosaic_0001>

<llo_original>
// kernel: tpu_custom_call.1
$region0: #{tpu_custom_call.1}
  #allocation0 [shape = 'u32[]', space=smem, size = 0x4, offset = 0x4, fixed_abs, tag = 'smem constant byte address 0x4 - core index']
  #allocation1 [shape = 'u32[72,128]{1,0:T(1,128)}', space=vmem, size = 0x9000, scoped, tag = 'internal scratch']
  %s0 = inlined_call_operand.hbm [shape: bf16[8,512], index: 0, kind: input, shape index: {}]
  %s1 = inlined_call_operand.hbm [shape: bf16[512,256], index: 1, kind: input, shape index: {}]
  %s2 = inlined_call_operand.hbm [shape: f32[1,256], index: 2, kind: input, shape index: {}]
  %s3 = inlined_call_operand.hbm [shape: bf16[256,128], index: 3, kind: input, shape index: {}]
  %s4 = inlined_call_operand.vmem [shape: f32[1,128], index: 4, kind: input, shape index: {}]
  %s5 = inlined_call_operand.hbm [shape: bf16[128,128], index: 5, kind: input, shape index: {}]
  %s6 = inlined_call_operand.vmem [shape: f32[1,128], index: 6, kind: input, shape index: {}]
  %s7 = inlined_call_operand.hbm [shape: f32[8,128], index: 7, kind: output, shape index: {}]
  %s8 = sld [smem:[#allocation0]]
  $region58: #{tpu_custom_call.1} parent=0
    _
  %s10 = ssub.s32 1, %s8
  %s11 = scalar_select 0, %s10, %s8
  $region1: #{tpu_custom_call.1} parent=0
    #allocation2 [shape = 'u8[8192]{0}', space=vmem, size = 0x2000, scoped, tag = 'input window, operand 0, single buffered']
    #allocation3 [shape = 's32[1]{0}', space=sflag, size = 0x4, scoped, tag = 'scoped memory for tpu_custom_call.1']
    #allocation4 [shape = 's32[1]{0}', space=sflag, size = 0x4, scoped, tag = 'scoped memory for tpu_custom_call.1']
    #allocation5 [shape = 'u8[262144]{0}', space=vmem, size = 0x40000, scoped, tag = 'input window, operand 1, single buffered']
    #allocation6 [shape = 's32[1]{0}', space=sflag, size = 0x4, scoped, tag = 'scoped memory for tpu_custom_call.1']
    #allocation7 [shape = 'u8[1024]{0}', space=vmem, size = 0x400, scoped, tag = 'input window, operand 2, single buffered']
    #allocation8 [shape = 'u8[65536]{0}', space=vmem, size = 0x10000, scoped, tag = 'input window, operand 3, single buffered']
    #allocation9 [shape = 's32[1]{0}', space=sflag, size = 0x4, scoped, tag = 'scoped memory for tpu_custom_call.1']
    #allocation10 [shape = 'u8[32768]{0}', space=vmem, size = 0x8000, scoped, tag = 'input window, operand 5, single buffered']
    #allocation11 [shape = 'u8[4096]{0}', space=vmem, size = 0x1000, scoped, tag = 'output window, operand 0, single buffered']
    %12 = vsyncpa [#allocation3], 0
    %13 = vsyncpa [#allocation6], 0
    %14 = vsyncpa [#allocation9], 0
    %15 = vsyncpa [#allocation4], 0
    // Predicated region
    $region2: #{tpu_custom_call.1} parent=1 // pred_check
      _
    $region3: #{tpu_custom_call.1} parent=1 // pred_check_branch
      %17 = sbr.rel (0) target = $region5
    $region4: #{tpu_custom_call.1} parent=1 // pred_region
      %19 = vsyncadd [#allocation3], 0
      %s21 = sshll.u32 %s0, 4
      %s22 = int_to_ptr.hbm [resolvable:$true] %s21
      %s23 = sshll.u32 [#allocation2], 4
      %s24 = int_to_ptr.vmem [resolvable:$true] %s23
      %26 = dma.hbm_to_vmem [thread:$0]  %s22, 256, %s24, [#allocation3]
    $region5: #{tpu_custom_call.1} parent=1 // pred_fallthru
      _
    // Predicated region
    $region6: #{tpu_custom_call.1} parent=1 // pred_check
      _
    $region7: #{tpu_custom_call.1} parent=1 // pred_check_branch
      %28 = sbr.rel (0) target = $region9
    $region8: #{tpu_custom_call.1} parent=1 // pred_region
      %30 = vsyncadd [#allocation6], 0
      %s31 = sshll.u32 %s1, 4
      %s32 = int_to_ptr.hbm [resolvable:$true] %s31
      %s33 = sshll.u32 [#allocation5], 4
      %s34 = int_to_ptr.vmem [resolvable:$true] %s33
      %39 = dma.hbm_to_vmem [thread:$0]  %s32, 8192, %s34, [#allocation6], 128, 128, 8
    $region9: #{tpu_custom_call.1} parent=1 // pred_fallthru
      _
    // Predicated region
    $region10: #{tpu_custom_call.1} parent=1 // pred_check
      _
    $region11: #{tpu_custom_call.1} parent=1 // pred_check_branch
      %41 = sbr.rel (0) target = $region13
    $region12: #{tpu_custom_call.1} parent=1 // pred_region
      %43 = vsyncadd [#allocation6], 0
      %s45 = sshll.u32 %s2, 4
      %s46 = int_to_ptr.hbm [resolvable:$true] %s45
      %s47 = sshll.u32 [#allocation7], 4
      %s48 = int_to_ptr.vmem [resolvable:$true] %s47
      %50 = dma.hbm_to_vmem [thread:$0]  %s46, 32, %s48, [#allocation6]
    $region13: #{tpu_custom_call.1} parent=1 // pred_fallthru
      _
    // Predicated region
    $region14: #{tpu_custom_call.1} parent=1 // pred_check
      _
    $region15: #{tpu_custom_call.1} parent=1 // pred_check_branch
      %52 = sbr.rel (0) target = $region17
    $region16: #{tpu_custom_call.1} parent=1 // pred_region
      %54 = vsyncadd [#allocation9], 0
      %s55 = sshll.u32 %s3, 4
      %s56 = int_to_ptr.hbm [resolvable:$true] %s55
      %s57 = sshll.u32 [#allocation8], 4
      %s58 = int_to_ptr.vmem [resolvable:$true] %s57
      %63 = dma.hbm_to_vmem [thread:$0]  %s56, 2048, %s58, [#allocation9], 64, 64, 4
    $region17: #{tpu_custom_call.1} parent=1 // pred_fallthru
      _
    // Predicated region
    $region18: #{tpu_custom_call.1} parent=1 // pred_check
      _
    $region19: #{tpu_custom_call.1} parent=1 // pred_check_branch
      %65 = sbr.rel (0) target = $region21
    $region20: #{tpu_custom_call.1} parent=1 // pred_region
      _
    $region21: #{tpu_custom_call.1} parent=1 // pred_fallthru
      _
    // Predicated region
    $region22: #{tpu_custom_call.1} parent=1 // pred_check
      _
    $region23: #{tpu_custom_call.1} parent=1 // pred_check_branch
      %67 = sbr.rel (0) target = $region25
    $region24: #{tpu_custom_call.1} parent=1 // pred_region
      %69 = vsyncadd [#allocation9], 0
      %s70 = sshll.u32 %s5, 4
      %s71 = int_to_ptr.hbm [resolvable:$true] %s70
      %s72 = sshll.u32 [#allocation10], 4
      %s73 = int_to_ptr.vmem [resolvable:$true] %s72
      %78 = dma.hbm_to_vmem [thread:$0]  %s71, 1024, %s73, [#allocation9], 64, 64, 4
    $region25: #{tpu_custom_call.1} parent=1 // pred_fallthru
      _
    // Predicated region
    $region26: #{tpu_custom_call.1} parent=1 // pred_check
      _
    $region27: #{tpu_custom_call.1} parent=1 // pred_check_branch
      %80 = sbr.rel (0) target = $region29
    $region28: #{tpu_custom_call.1} parent=1 // pred_region
      _
    $region29: #{tpu_custom_call.1} parent=1 // pred_fallthru
      _
    // Predicated region
    $region30: #{tpu_custom_call.1} parent=1 // pred_check
      _
    $region31: #{tpu_custom_call.1} parent=1 // pred_check_branch
      %82 = sbr.rel (0) target = $region33
    $region32: #{tpu_custom_call.1} parent=1 // pred_region
      %84 = dma.done [#allocation3], 256
    $region33: #{tpu_custom_call.1} parent=1 // pred_fallthru
      _
    // Predicated region
    $region34: #{tpu_custom_call.1} parent=1 // pred_check
      _
    $region35: #{tpu_custom_call.1} parent=1 // pred_check_branch
      %86 = sbr.rel (0) target = $region37
    $region36: #{tpu_custom_call.1} parent=1 // pred_region
      %88 = dma.done [#allocation6], 8192
    $region37: #{tpu_custom_call.1} parent=1 // pred_fallthru
      _
    // Predicated region
    $region38: #{tpu_custom_call.1} parent=1 // pred_check
      _
    $region39: #{tpu_custom_call.1} parent=1 // pred_check_branch
      %90 = sbr.rel (0) target = $region41
    $region40: #{tpu_custom_call.1} parent=1 // pred_region
      %92 = dma.done [#allocation6], 32
    $region41: #{tpu_custom_call.1} parent=1 // pred_fallthru
      _
    // Predicated region
    $region42: #{tpu_custom_call.1} parent=1 // pred_check
      _
    $region43: #{tpu_custom_call.1} parent=1 // pred_check_branch
      %94 = sbr.rel (0) target = $region45
    $region44: #{tpu_custom_call.1} parent=1 // pred_region
      %96 = dma.done [#allocation9], 2048
    $region45: #{tpu_custom_call.1} parent=1 // pred_fallthru
      _
    // Predicated region
    $region46: #{tpu_custom_call.1} parent=1 // pred_check
      _
    $region47: #{tpu_custom_call.1} parent=1 // pred_check_branch
      %98 = sbr.rel (0) target = $region49
    $region48: #{tpu_custom_call.1} parent=1 // pred_region
      %100 = dma.done [#allocation9], 1024
    $region49: #{tpu_custom_call.1} parent=1 // pred_fallthru
      _
    %v101 = vld [vmem:[#allocation2] sm:$0xff]
    %v102 = vld [vmem:[#allocation2 + $0x8] sm:$0xff]
    %v103 = vld [vmem:[#allocation5] sm:$0xff]
    %v104 = vld [vmem:[#allocation5 + $0x8] sm:$0xff]
    %v105 = vld [vmem:[#allocation5 + $0x10] sm:$0xff]
    %v106 = vld [vmem:[#allocation5 + $0x18] sm:$0xff]
    %v107 = vld [vmem:[#allocation5 + $0x20] sm:$0xff]
    %v108 = vld [vmem:[#allocation5 + $0x28] sm:$0xff]
    %v109 = vld [vmem:[#allocation5 + $0x30] sm:$0xff]
    %v110 = vld [vmem:[#allocation5 + $0x38] sm:$0xff]
    %v111 = vld [vmem:[#allocation5 + $0x40] sm:$0xff]
    %v112 = vld [vmem:[#allocation5 + $0x48] sm:$0xff]
    %v113 = vld [vmem:[#allocation5 + $0x50] sm:$0xff]
    %v114 = vld [vmem:[#allocation5 + $0x58] sm:$0xff]
    %v115 = vld [vmem:[#allocation5 + $0x60] sm:$0xff]
    %v116 = vld [vmem:[#allocation5 + $0x68] sm:$0xff]
    %v117 = vld [vmem:[#allocation5 + $0x70] sm:$0xff]
    %v118 = vld [vmem:[#allocation5 + $0x78] sm:$0xff]
    %v119 = vld [vmem:[#allocation5 + $0x80] sm:$0xff]
    %v120 = vld [vmem:[#allocation5 + $0x88] sm:$0xff]
    %v121 = vld [vmem:[#allocation5 + $0x90] sm:$0xff]
    %v122 = vld [vmem:[#allocation5 + $0x98] sm:$0xff]
    %v123 = vld [vmem:[#allocation5 + $0xa0] sm:$0xff]
    %v124 = vld [vmem:[#allocation5 + $0xa8] sm:$0xff]
    %v125 = vld [vmem:[#allocation5 + $0xb0] sm:$0xff]
    %v126 = vld [vmem:[#allocation5 + $0xb8] sm:$0xff]
    %v127 = vld [vmem:[#allocation5 + $0xc0] sm:$0xff]
    %v128 = vld [vmem:[#allocation5 + $0xc8] sm:$0xff]
    %v129 = vld [vmem:[#allocation5 + $0xd0] sm:$0xff]
    %v130 = vld [vmem:[#allocation5 + $0xd8] sm:$0xff]
    %v131 = vld [vmem:[#allocation5 + $0xe0] sm:$0xff]
    %v132 = vld [vmem:[#allocation5 + $0xe8] sm:$0xff]
    %v133 = vld [vmem:[#allocation5 + $0xf0] sm:$0xff]
    %v134 = vld [vmem:[#allocation5 + $0xf8] sm:$0xff]
    %v135 = vld [vmem:[#allocation5 + $0x100] sm:$0xff]
    %v136 = vld [vmem:[#allocation5 + $0x108] sm:$0xff]
    %v137 = vld [vmem:[#allocation5 + $0x110] sm:$0xff]
    %v138 = vld [vmem:[#allocation5 + $0x118] sm:$0xff]
    %v139 = vld [vmem:[#allocation5 + $0x120] sm:$0xff]
    %v140 = vld [vmem:[#allocation5 + $0x128] sm:$0xff]
    %v141 = vld [vmem:[#allocation5 + $0x130] sm:$0xff]
    %v142 = vld [vmem:[#allocation5 + $0x138] sm:$0xff]
    %v143 = vld [vmem:[#allocation5 + $0x140] sm:$0xff]
    %v144 = vld [vmem:[#allocation5 + $0x148] sm:$0xff]
    %v145 = vld [vmem:[#allocation5 + $0x150] sm:$0xff]
    %v146 = vld [vmem:[#allocation5 + $0x158] sm:$0xff]
    %v147 = vld [vmem:[#allocation5 + $0x160] sm:$0xff]
    %v148 = vld [vmem:[#allocation5 + $0x168] sm:$0xff]
    %v149 = vld [vmem:[#allocation5 + $0x170] sm:$0xff]
    %v150 = vld [vmem:[#allocation5 + $0x178] sm:$0xff]
    %v151 = vld [vmem:[#allocation5 + $0x180] sm:$0xff]
    %v152 = vld [vmem:[#allocation5 + $0x188] sm:$0xff]
    %v153 = vld [vmem:[#allocation5 + $0x190] sm:$0xff]
    %v154 = vld [vmem:[#allocation5 + $0x198] sm:$0xff]
    %v155 = vld [vmem:[#allocation5 + $0x1a0] sm:$0xff]
    %v156 = vld [vmem:[#allocation5 + $0x1a8] sm:$0xff]
    %v157 = vld [vmem:[#allocation5 + $0x1b0] sm:$0xff]
    %v158 = vld [vmem:[#allocation5 + $0x1b8] sm:$0xff]
    %v159 = vld [vmem:[#allocation5 + $0x1c0] sm:$0xff]
    %v160 = vld [vmem:[#allocation5 + $0x1c8] sm:$0xff]
    %v161 = vld [vmem:[#allocation5 + $0x1d0] sm:$0xff]
    %v162 = vld [vmem:[#allocation5 + $0x1d8] sm:$0xff]
    %v163 = vld [vmem:[#allocation5 + $0x1e0] sm:$0xff]
    %v164 = vld [vmem:[#allocation5 + $0x1e8] sm:$0xff]
    %v165 = vld [vmem:[#allocation5 + $0x1f0] sm:$0xff]
    %v166 = vld [vmem:[#allocation5 + $0x1f8] sm:$0xff]
    %v167 = vld [vmem:[#allocation7] sm:$0x3]
    %v169 = vperm.slane %v167, 0
    %v170 = vperm.slane %v167, 1
    %v175 = vunpack.c.l.b16 %v101
    %v176 = vunpack.c.h.b16 %v101
    %v177 = vunpack.c.l.b16 %v102
    %v178 = vunpack.c.h.b16 %v102
    %v179 = vpack.c.b16 %v175, %v175
    %v180 = vpack.c.b16 %v176, %v176
    %v181 = vpack.c.b16 %v177, %v177
    %v182 = vpack.c.b16 %v178, %v178
    %v251 = vunpack.c.l.b16 %v103
    %v252 = vunpack.c.h.b16 %v103
    %v253 = vunpack.c.l.b16 %v104
    %v254 = vunpack.c.h.b16 %v104
    %v255 = vunpack.c.l.b16 %v105
    %v256 = vunpack.c.h.b16 %v105
    %v257 = vunpack.c.l.b16 %v106
    %v258 = vunpack.c.h.b16 %v106
    %v259 = vunpack.c.l.b16 %v107
    %v260 = vunpack.c.h.b16 %v107
    %v261 = vunpack.c.l.b16 %v108
    %v262 = vunpack.c.h.b16 %v108
    %v263 = vunpack.c.l.b16 %v109
    %v264 = vunpack.c.h.b16 %v109
    %v265 = vunpack.c.l.b16 %v110
    %v266 = vunpack.c.h.b16 %v110
    %v267 = vunpack.c.l.b16 %v111
    %v268 = vunpack.c.h.b16 %v111
    %v269 = vunpack.c.l.b16 %v112
    %v270 = vunpack.c.h.b16 %v112
    %v271 = vunpack.c.l.b16 %v113
    %v272 = vunpack.c.h.b16 %v113
    %v273 = vunpack.c.l.b16 %v114
    %v274 = vunpack.c.h.b16 %v114
    %v275 = vunpack.c.l.b16 %v115
    %v276 = vunpack.c.h.b16 %v115
    %v277 = vunpack.c.l.b16 %v116
    %v278 = vunpack.c.h.b16 %v116
    %v279 = vunpack.c.l.b16 %v117
    %v280 = vunpack.c.h.b16 %v117
    %v281 = vunpack.c.l.b16 %v118
    %v282 = vunpack.c.h.b16 %v118
    %v283 = vunpack.c.l.b16 %v119
    %v284 = vunpack.c.h.b16 %v119
    %v285 = vunpack.c.l.b16 %v120
    %v286 = vunpack.c.h.b16 %v120
    %v287 = vunpack.c.l.b16 %v121
    %v288 = vunpack.c.h.b16 %v121
    %v289 = vunpack.c.l.b16 %v122
    %v290 = vunpack.c.h.b16 %v122
    %v291 = vunpack.c.l.b16 %v123
    %v292 = vunpack.c.h.b16 %v123
    %v293 = vunpack.c.l.b16 %v124
    %v294 = vunpack.c.h.b16 %v124
    %v295 = vunpack.c.l.b16 %v125
    %v296 = vunpack.c.h.b16 %v125
    %v297 = vunpack.c.l.b16 %v126
    %v298 = vunpack.c.h.b16 %v126
    %v299 = vunpack.c.l.b16 %v127
    %v300 = vunpack.c.h.b16 %v127
    %v301 = vunpack.c.l.b16 %v128
    %v302 = vunpack.c.h.b16 %v128
    %v303 = vunpack.c.l.b16 %v129
    %v304 = vunpack.c.h.b16 %v129
    %v305 = vunpack.c.l.b16 %v130
    %v306 = vunpack.c.h.b16 %v130
    %v307 = vunpack.c.l.b16 %v131
    %v308 = vunpack.c.h.b16 %v131
    %v309 = vunpack.c.l.b16 %v132
    %v310 = vunpack.c.h.b16 %v132
    %v311 = vunpack.c.l.b16 %v133
    %v312 = vunpack.c.h.b16 %v133
    %v313 = vunpack.c.l.b16 %v134
    %v314 = vunpack.c.h.b16 %v134
    %v315 = vunpack.c.l.b16 %v135
    %v316 = vunpack.c.h.b16 %v135
    %v317 = vunpack.c.l.b16 %v136
    %v318 = vunpack.c.h.b16 %v136
    %v319 = vunpack.c.l.b16 %v137
    %v320 = vunpack.c.h.b16 %v137
    %v321 = vunpack.c.l.b16 %v138
    %v322 = vunpack.c.h.b16 %v138
    %v323 = vunpack.c.l.b16 %v139
    %v324 = vunpack.c.h.b16 %v139
    %v325 = vunpack.c.l.b16 %v140
    %v326 = vunpack.c.h.b16 %v140
    %v327 = vunpack.c.l.b16 %v141
    %v328 = vunpack.c.h.b16 %v141
    %v329 = vunpack.c.l.b16 %v142
    %v330 = vunpack.c.h.b16 %v142
    %v331 = vunpack.c.l.b16 %v143
    %v332 = vunpack.c.h.b16 %v143
    %v333 = vunpack.c.l.b16 %v144
    %v334 = vunpack.c.h.b16 %v144
    %v335 = vunpack.c.l.b16 %v145
    %v336 = vunpack.c.h.b16 %v145
    %v337 = vunpack.c.l.b16 %v146
    %v338 = vunpack.c.h.b16 %v146
    %v339 = vunpack.c.l.b16 %v147
    %v340 = vunpack.c.h.b16 %v147
    %v341 = vunpack.c.l.b16 %v148
    %v342 = vunpack.c.h.b16 %v148
    %v343 = vunpack.c.l.b16 %v149
    %v344 = vunpack.c.h.b16 %v149
    %v345 = vunpack.c.l.b16 %v150
    %v346 = vunpack.c.h.b16 %v150
    %v347 = vunpack.c.l.b16 %v151
    %v348 = vunpack.c.h.b16 %v151
    %v349 = vunpack.c.l.b16 %v152
    %v350 = vunpack.c.h.b16 %v152
    %v351 = vunpack.c.l.b16 %v153
    %v352 = vunpack.c.h.b16 %v153
    %v353 = vunpack.c.l.b16 %v154
    %v354 = vunpack.c.h.b16 %v154
    %v355 = vunpack.c.l.b16 %v155
    %v356 = vunpack.c.h.b16 %v155
    %v357 = vunpack.c.l.b16 %v156
    %v358 = vunpack.c.h.b16 %v156
    %v359 = vunpack.c.l.b16 %v157
    %v360 = vunpack.c.h.b16 %v157
    %v361 = vunpack.c.l.b16 %v158
    %v362 = vunpack.c.h.b16 %v158
    %v363 = vunpack.c.l.b16 %v159
    %v364 = vunpack.c.h.b16 %v159
    %v365 = vunpack.c.l.b16 %v160
    %v366 = vunpack.c.h.b16 %v160
    %v367 = vunpack.c.l.b16 %v161
    %v368 = vunpack.c.h.b16 %v161
    %v369 = vunpack.c.l.b16 %v162
    %v370 = vunpack.c.h.b16 %v162
    %v371 = vunpack.c.l.b16 %v163
    %v372 = vunpack.c.h.b16 %v163
    %v373 = vunpack.c.l.b16 %v164
    %v374 = vunpack.c.h.b16 %v164
    %v375 = vunpack.c.l.b16 %v165
    %v376 = vunpack.c.h.b16 %v165
    %v377 = vunpack.c.l.b16 %v166
    %v378 = vunpack.c.h.b16 %v166
    %v379 = vpack.c.b16 %v253, %v251
    %v380 = vpack.c.b16 %v254, %v252
    %v381 = vpack.c.b16 %v257, %v255
    %v382 = vpack.c.b16 %v258, %v256
    %v383 = vpack.c.b16 %v261, %v259
    %v384 = vpack.c.b16 %v262, %v260
    %v385 = vpack.c.b16 %v265, %v263
    %v386 = vpack.c.b16 %v266, %v264
    %v387 = vpack.c.b16 %v269, %v267
    %v388 = vpack.c.b16 %v270, %v268
    %v389 = vpack.c.b16 %v273, %v271
    %v390 = vpack.c.b16 %v274, %v272
    %v391 = vpack.c.b16 %v277, %v275
    %v392 = vpack.c.b16 %v278, %v276
    %v393 = vpack.c.b16 %v281, %v279
    %v394 = vpack.c.b16 %v282, %v280
    %v395 = vpack.c.b16 %v285, %v283
    %v396 = vpack.c.b16 %v286, %v284
    %v397 = vpack.c.b16 %v289, %v287
    %v398 = vpack.c.b16 %v290, %v288
    %v399 = vpack.c.b16 %v293, %v291
    %v400 = vpack.c.b16 %v294, %v292
    %v401 = vpack.c.b16 %v297, %v295
    %v402 = vpack.c.b16 %v298, %v296
    %v403 = vpack.c.b16 %v301, %v299
    %v404 = vpack.c.b16 %v302, %v300
    %v405 = vpack.c.b16 %v305, %v303
    %v406 = vpack.c.b16 %v306, %v304
    %v407 = vpack.c.b16 %v309, %v307
    %v408 = vpack.c.b16 %v310, %v308
    %v409 = vpack.c.b16 %v313, %v311
    %v410 = vpack.c.b16 %v314, %v312
    %v411 = vpack.c.b16 %v317, %v315
    %v412 = vpack.c.b16 %v318, %v316
    %v413 = vpack.c.b16 %v321, %v319
    %v414 = vpack.c.b16 %v322, %v320
    %v415 = vpack.c.b16 %v325, %v323
    %v416 = vpack.c.b16 %v326, %v324
    %v417 = vpack.c.b16 %v329, %v327
    %v418 = vpack.c.b16 %v330, %v328
    %v419 = vpack.c.b16 %v333, %v331
    %v420 = vpack.c.b16 %v334, %v332
    %v421 = vpack.c.b16 %v337, %v335
    %v422 = vpack.c.b16 %v338, %v336
    %v423 = vpack.c.b16 %v341, %v339
    %v424 = vpack.c.b16 %v342, %v340
    %v425 = vpack.c.b16 %v345, %v343
    %v426 = vpack.c.b16 %v346, %v344
    %v427 = vpack.c.b16 %v349, %v347
    %v428 = vpack.c.b16 %v350, %v348
    %v429 = vpack.c.b16 %v353, %v351
    %v430 = vpack.c.b16 %v354, %v352
    %v431 = vpack.c.b16 %v357, %v355
    %v432 = vpack.c.b16 %v358, %v356
    %v433 = vpack.c.b16 %v361, %v359
    %v434 = vpack.c.b16 %v362, %v360
    %v435 = vpack.c.b16 %v365, %v363
    %v436 = vpack.c.b16 %v366, %v364
    %v437 = vpack.c.b16 %v369, %v367
    %v438 = vpack.c.b16 %v370, %v368
    %v439 = vpack.c.b16 %v373, %v371
    %v440 = vpack.c.b16 %v374, %v372
    %v441 = vpack.c.b16 %v377, %v375
    %v442 = vpack.c.b16 %v378, %v376
    %507 = vmatpush.bf16.msra.mxu0 %v393
    %508 = vmatpush.bf16.msra.mxu0 %v391
    %509 = vmatpush.bf16.msra.mxu0 %v389
    %510 = vmatpush.bf16.msra.mxu0 %v387
    %511 = vmatpush.bf16.msra.mxu0 %v385
    %512 = vmatpush.bf16.msra.mxu0 %v383
    %513 = vmatpush.bf16.msra.mxu0 %v381
    %514 = vmatpush.bf16.msra.mxu0 %v379
    %515 = vmatmul.bf16.gmra.mxu0 %v179
    %v516 = vpop.f32.mrf.mxu0
    %v517 = vadd.f32 %v169, %v516
    %v518 = vpop.f32.mrf.mxu0
    %519 = vdwg.mxu0
    %520 = vmatpush.bf16.msra.mxu0 %v409
    %521 = vmatpush.bf16.msra.mxu0 %v407
    %522 = vmatpush.bf16.msra.mxu0 %v405
    %523 = vmatpush.bf16.msra.mxu0 %v403
    %524 = vmatpush.bf16.msra.mxu0 %v401
    %525 = vmatpush.bf16.msra.mxu0 %v399
    %526 = vmatpush.bf16.msra.mxu0 %v397
    %527 = vmatpush.bf16.msra.mxu0 %v395
    %528 = vmatmul.bf16.gmra.mxu0 %v180
    %v529 = vpop.f32.mrf.mxu0
    %v530 = vadd.f32 %v517, %v529
    %v531 = vpop.f32.mrf.mxu0
    %532 = vdwg.mxu0
    %533 = vmatpush.bf16.msra.mxu0 %v425
    %534 = vmatpush.bf16.msra.mxu0 %v423
    %535 = vmatpush.bf16.msra.mxu0 %v421
    %536 = vmatpush.bf16.msra.mxu0 %v419
    %537 = vmatpush.bf16.msra.mxu0 %v417
    %538 = vmatpush.bf16.msra.mxu0 %v415
    %539 = vmatpush.bf16.msra.mxu0 %v413
    %540 = vmatpush.bf16.msra.mxu0 %v411
    %541 = vmatmul.bf16.gmra.mxu0 %v181
    %v542 = vpop.f32.mrf.mxu0
    %v543 = vadd.f32 %v530, %v542
    %v544 = vpop.f32.mrf.mxu0
    %545 = vdwg.mxu0
    %546 = vmatpush.bf16.msra.mxu0 %v441
    %547 = vmatpush.bf16.msra.mxu0 %v439
    %548 = vmatpush.bf16.msra.mxu0 %v437
    %549 = vmatpush.bf16.msra.mxu0 %v435
    %550 = vmatpush.bf16.msra.mxu0 %v433
    %551 = vmatpush.bf16.msra.mxu0 %v431
    %552 = vmatpush.bf16.msra.mxu0 %v429
    %553 = vmatpush.bf16.msra.mxu0 %v427
    %554 = vmatmul.bf16.gmra.mxu0 %v182
    %v555 = vpop.f32.mrf.mxu0
    %v556 = vadd.f32 %v543, %v555
    %v557 = vpop.f32.mrf.mxu0
    %558 = vdwg.mxu0
    %559 = vmatpush.bf16.msra.mxu0 %v394
    %560 = vmatpush.bf16.msra.mxu0 %v392
    %561 = vmatpush.bf16.msra.mxu0 %v390
    %562 = vmatpush.bf16.msra.mxu0 %v388
    %563 = vmatpush.bf16.msra.mxu0 %v386
    %564 = vmatpush.bf16.msra.mxu0 %v384
    %565 = vmatpush.bf16.msra.mxu0 %v382
    %566 = vmatpush.bf16.msra.mxu0 %v380
    %567 = vmatmul.bf16.gmra.mxu0 %v179
    %v568 = vpop.f32.mrf.mxu0
    %v569 = vadd.f32 %v170, %v568
    %v570 = vpop.f32.mrf.mxu0
    %571 = vdwg.mxu0
    %572 = vmatpush.bf16.msra.mxu0 %v410
    %573 = vmatpush.bf16.msra.mxu0 %v408
    %574 = vmatpush.bf16.msra.mxu0 %v406
    %575 = vmatpush.bf16.msra.mxu0 %v404
    %576 = vmatpush.bf16.msra.mxu0 %v402
    %577 = vmatpush.bf16.msra.mxu0 %v400
    %578 = vmatpush.bf16.msra.mxu0 %v398
    %579 = vmatpush.bf16.msra.mxu0 %v396
    %580 = vmatmul.bf16.gmra.mxu0 %v180
    %v581 = vpop.f32.mrf.mxu0
    %v582 = vadd.f32 %v569, %v581
    %v583 = vpop.f32.mrf.mxu0
    %584 = vdwg.mxu0
    %585 = vmatpush.bf16.msra.mxu0 %v426
    %586 = vmatpush.bf16.msra.mxu0 %v424
    %587 = vmatpush.bf16.msra.mxu0 %v422
    %588 = vmatpush.bf16.msra.mxu0 %v420
    %589 = vmatpush.bf16.msra.mxu0 %v418
    %590 = vmatpush.bf16.msra.mxu0 %v416
    %591 = vmatpush.bf16.msra.mxu0 %v414
    %592 = vmatpush.bf16.msra.mxu0 %v412
    %593 = vmatmul.bf16.gmra.mxu0 %v181
    %v594 = vpop.f32.mrf.mxu0
    %v595 = vadd.f32 %v582, %v594
    %v596 = vpop.f32.mrf.mxu0
    %597 = vdwg.mxu0
    %598 = vmatpush.bf16.msra.mxu0 %v442
    %599 = vmatpush.bf16.msra.mxu0 %v440
    %600 = vmatpush.bf16.msra.mxu0 %v438
    %601 = vmatpush.bf16.msra.mxu0 %v436
    %602 = vmatpush.bf16.msra.mxu0 %v434
    %603 = vmatpush.bf16.msra.mxu0 %v432
    %604 = vmatpush.bf16.msra.mxu0 %v430
    %605 = vmatpush.bf16.msra.mxu0 %v428
    %606 = vmatmul.bf16.gmra.mxu0 %v182
    %v607 = vpop.f32.mrf.mxu0
    %v608 = vadd.f32 %v595, %v607
    %v609 = vpop.f32.mrf.mxu0
    %610 = vdwg.mxu0
    %v611 = vmax.f32 %v556, 0.0
    %v612 = vmax.f32 %v608, 0.0
    %v613 = vpack.c.bf16 %v611, %v611
    %v614 = vpack.c.bf16 %v612, %v612
    %v615 = vld [vmem:[#allocation8] sm:$0xf]
    %v616 = vld [vmem:[#allocation8 + $0x4] sm:$0xf]
    %v617 = vld [vmem:[#allocation8 + $0x8] sm:$0xf]
    %v618 = vld [vmem:[#allocation8 + $0xc] sm:$0xf]
    %v619 = vld [vmem:[#allocation8 + $0x10] sm:$0xf]
    %v620 = vld [vmem:[#allocation8 + $0x14] sm:$0xf]
    %v621 = vld [vmem:[#allocation8 + $0x18] sm:$0xf]
    %v622 = vld [vmem:[#allocation8 + $0x1c] sm:$0xf]
    %v623 = vld [vmem:[#allocation8 + $0x20] sm:$0xf]
    %v624 = vld [vmem:[#allocation8 + $0x24] sm:$0xf]
    %v625 = vld [vmem:[#allocation8 + $0x28] sm:$0xf]
    %v626 = vld [vmem:[#allocation8 + $0x2c] sm:$0xf]
    %v627 = vld [vmem:[#allocation8 + $0x30] sm:$0xf]
    %v628 = vld [vmem:[#allocation8 + $0x34] sm:$0xf]
    %v629 = vld [vmem:[#allocation8 + $0x38] sm:$0xf]
    %v630 = vld [vmem:[#allocation8 + $0x3c] sm:$0xf]
    %v631 = vld [vmem:[#allocation8 + $0x40] sm:$0xf]
    %v632 = vld [vmem:[#allocation8 + $0x44] sm:$0xf]
    %v633 = vld [vmem:[#allocation8 + $0x48] sm:$0xf]
    %v634 = vld [vmem:[#allocation8 + $0x4c] sm:$0xf]
    %v635 = vld [vmem:[#allocation8 + $0x50] sm:$0xf]
    %v636 = vld [vmem:[#allocation8 + $0x54] sm:$0xf]
    %v637 = vld [vmem:[#allocation8 + $0x58] sm:$0xf]
    %v638 = vld [vmem:[#allocation8 + $0x5c] sm:$0xf]
    %v639 = vld [vmem:[#allocation8 + $0x60] sm:$0xf]
    %v640 = vld [vmem:[#allocation8 + $0x64] sm:$0xf]
    %v641 = vld [vmem:[#allocation8 + $0x68] sm:$0xf]
    %v642 = vld [vmem:[#allocation8 + $0x6c] sm:$0xf]
    %v643 = vld [vmem:[#allocation8 + $0x70] sm:$0xf]
    %v644 = vld [vmem:[#allocation8 + $0x74] sm:$0xf]
    %v645 = vld [vmem:[#allocation8 + $0x78] sm:$0xf]
    %v646 = vld [vmem:[#allocation8 + $0x7c] sm:$0xf]
    %v647 = vld [vmem:[%s4] sm:$0x1]
    %v649 = vperm.slane %v647, 0
    %v683 = vunpack.c.l.b16 %v615
    %v684 = vunpack.c.l.b16 %v616
    %v685 = vunpack.c.l.b16 %v617
    %v686 = vunpack.c.l.b16 %v618
    %v687 = vunpack.c.l.b16 %v619
    %v688 = vunpack.c.l.b16 %v620
    %v689 = vunpack.c.l.b16 %v621
    %v690 = vunpack.c.l.b16 %v622
    %v691 = vunpack.c.l.b16 %v623
    %v692 = vunpack.c.l.b16 %v624
    %v693 = vunpack.c.l.b16 %v625
    %v694 = vunpack.c.l.b16 %v626
    %v695 = vunpack.c.l.b16 %v627
    %v696 = vunpack.c.l.b16 %v628
    %v697 = vunpack.c.l.b16 %v629
    %v698 = vunpack.c.l.b16 %v630
    %v699 = vunpack.c.l.b16 %v631
    %v700 = vunpack.c.l.b16 %v632
    %v701 = vunpack.c.l.b16 %v633
    %v702 = vunpack.c.l.b16 %v634
    %v703 = vunpack.c.l.b16 %v635
    %v704 = vunpack.c.l.b16 %v636
    %v705 = vunpack.c.l.b16 %v637
    %v706 = vunpack.c.l.b16 %v638
    %v707 = vunpack.c.l.b16 %v639
    %v708 = vunpack.c.l.b16 %v640
    %v709 = vunpack.c.l.b16 %v641
    %v710 = vunpack.c.l.b16 %v642
    %v711 = vunpack.c.l.b16 %v643
    %v712 = vunpack.c.l.b16 %v644
    %v713 = vunpack.c.l.b16 %v645
    %v714 = vunpack.c.l.b16 %v646
    %v715 = vpack.c.b16 %v684, %v683
    %v716 = vpack.c.b16 %v686, %v685
    %v717 = vpack.c.b16 %v688, %v687
    %v718 = vpack.c.b16 %v690, %v689
    %v719 = vpack.c.b16 %v692, %v691
    %v720 = vpack.c.b16 %v694, %v693
    %v721 = vpack.c.b16 %v696, %v695
    %v722 = vpack.c.b16 %v698, %v697
    %v723 = vpack.c.b16 %v700, %v699
    %v724 = vpack.c.b16 %v702, %v701
    %v725 = vpack.c.b16 %v704, %v703
    %v726 = vpack.c.b16 %v706, %v705
    %v727 = vpack.c.b16 %v708, %v707
    %v728 = vpack.c.b16 %v710, %v709
    %v729 = vpack.c.b16 %v712, %v711
    %v730 = vpack.c.b16 %v714, %v713
    %747 = vmatpush.bf16.msra.mxu0 %v722
    %748 = vmatpush.bf16.msra.mxu0 %v721
    %749 = vmatpush.bf16.msra.mxu0 %v720
    %750 = vmatpush.bf16.msra.mxu0 %v719
    %751 = vmatpush.bf16.msra.mxu0 %v718
    %752 = vmatpush.bf16.msra.mxu0 %v717
    %753 = vmatpush.bf16.msra.mxu0 %v716
    %754 = vmatpush.bf16.msra.mxu0 %v715
    %755 = vmatmul.bf16.gmra.mxu0 %v613
    %v756 = vpop.f32.mrf.mxu0
    %v757 = vadd.f32 %v649, %v756
    %v758 = vpop.f32.mrf.mxu0
    %759 = vdwg.mxu0
    %760 = vmatpush.bf16.msra.mxu0 %v730
    %761 = vmatpush.bf16.msra.mxu0 %v729
    %762 = vmatpush.bf16.msra.mxu0 %v728
    %763 = vmatpush.bf16.msra.mxu0 %v727
    %764 = vmatpush.bf16.msra.mxu0 %v726
    %765 = vmatpush.bf16.msra.mxu0 %v725
    %766 = vmatpush.bf16.msra.mxu0 %v724
    %767 = vmatpush.bf16.msra.mxu0 %v723
    %768 = vmatmul.bf16.gmra.mxu0 %v614
    %v769 = vpop.f32.mrf.mxu0
    %v770 = vadd.f32 %v757, %v769
    %v771 = vpop.f32.mrf.mxu0
    %772 = vdwg.mxu0
    %v773 = vmax.f32 %v770, 0.0
    %v774 = vpack.c.bf16 %v773, %v773
    %v775 = vld [vmem:[#allocation10] sm:$0xf]
    %v776 = vld [vmem:[#allocation10 + $0x4] sm:$0xf]
    %v777 = vld [vmem:[#allocation10 + $0x8] sm:$0xf]
    %v778 = vld [vmem:[#allocation10 + $0xc] sm:$0xf]
    %v779 = vld [vmem:[#allocation10 + $0x10] sm:$0xf]
    %v780 = vld [vmem:[#allocation10 + $0x14] sm:$0xf]
    %v781 = vld [vmem:[#allocation10 + $0x18] sm:$0xf]
    %v782 = vld [vmem:[#allocation10 + $0x1c] sm:$0xf]
    %v783 = vld [vmem:[#allocation10 + $0x20] sm:$0xf]
    %v784 = vld [vmem:[#allocation10 + $0x24] sm:$0xf]
    %v785 = vld [vmem:[#allocation10 + $0x28] sm:$0xf]
    %v786 = vld [vmem:[#allocation10 + $0x2c] sm:$0xf]
    %v787 = vld [vmem:[#allocation10 + $0x30] sm:$0xf]
    %v788 = vld [vmem:[#allocation10 + $0x34] sm:$0xf]
    %v789 = vld [vmem:[#allocation10 + $0x38] sm:$0xf]
    %v790 = vld [vmem:[#allocation10 + $0x3c] sm:$0xf]
    %v791 = vld [vmem:[%s6] sm:$0x1]
    %v793 = vperm.slane %v791, 0
    %v811 = vunpack.c.l.b16 %v775
    %v812 = vunpack.c.l.b16 %v776
    %v813 = vunpack.c.l.b16 %v777
    %v814 = vunpack.c.l.b16 %v778
    %v815 = vunpack.c.l.b16 %v779
    %v816 = vunpack.c.l.b16 %v780
    %v817 = vunpack.c.l.b16 %v781
    %v818 = vunpack.c.l.b16 %v782
    %v819 = vunpack.c.l.b16 %v783
    %v820 = vunpack.c.l.b16 %v784
    %v821 = vunpack.c.l.b16 %v785
    %v822 = vunpack.c.l.b16 %v786
    %v823 = vunpack.c.l.b16 %v787
    %v824 = vunpack.c.l.b16 %v788
    %v825 = vunpack.c.l.b16 %v789
    %v826 = vunpack.c.l.b16 %v790
    %v827 = vpack.c.b16 %v812, %v811
    %v828 = vpack.c.b16 %v814, %v813
    %v829 = vpack.c.b16 %v816, %v815
    %v830 = vpack.c.b16 %v818, %v817
    %v831 = vpack.c.b16 %v820, %v819
    %v832 = vpack.c.b16 %v822, %v821
    %v833 = vpack.c.b16 %v824, %v823
    %v834 = vpack.c.b16 %v826, %v825
    %843 = vmatpush.bf16.msra.mxu0 %v834
    %844 = vmatpush.bf16.msra.mxu0 %v833
    %845 = vmatpush.bf16.msra.mxu0 %v832
    %846 = vmatpush.bf16.msra.mxu0 %v831
    %847 = vmatpush.bf16.msra.mxu0 %v830
    %848 = vmatpush.bf16.msra.mxu0 %v829
    %849 = vmatpush.bf16.msra.mxu0 %v828
    %850 = vmatpush.bf16.msra.mxu0 %v827
    %851 = vmatmul.bf16.gmra.mxu0 %v774
    %v852 = vpop.f32.mrf.mxu0
    %v853 = vadd.f32 %v793, %v852
    %v854 = vpop.f32.mrf.mxu0
    %855 = vdwg.mxu0
    %856 = vst [vmem:[#allocation11] sm:$0xff] %v853
    // Predicated region
    $region50: #{tpu_custom_call.1} parent=1 // pred_check
      _
    $region51: #{tpu_custom_call.1} parent=1 // pred_check_branch
      %858 = sbr.rel (0) target = $region53
    $region52: #{tpu_custom_call.1} parent=1 // pred_region
      %860 = vsyncadd [#allocation4], 0
      %s862 = sshll.u32 [#allocation11], 4
      %s863 = int_to_ptr.vmem [resolvable:$true] %s862
      %s864 = sshll.u32 %s7, 4
      %s865 = int_to_ptr.hbm [resolvable:$true] %s864
      %867 = dma.vmem_to_hbm [thread:$0]  %s863, 128, %s865, [#allocation4]
    $region53: #{tpu_custom_call.1} parent=1 // pred_fallthru
      _
    // Predicated region
    $region54: #{tpu_custom_call.1} parent=1 // pred_check
      _
    $region55: #{tpu_custom_call.1} parent=1 // pred_check_branch
      %869 = sbr.rel (0) target = $region57
    $region56: #{tpu_custom_call.1} parent=1 // pred_region
      %871 = dma.done [#allocation4], 128
    $region57: #{tpu_custom_call.1} parent=1 // pred_fallthru
      _
    %872 = vsyncpa [#allocation3], 1
    %873 = vsyncpa [#allocation6], 1
    %874 = vsyncpa [#allocation9], 1
    %875 = vsyncpa [#allocation4], 1

</llo_original>
